<compile_context>
chip_gen: v7x
topology: tpu7x:2x2x1
jax: 0.10.0
libtpu: 0.0.40
codegen_flags: <defaults>
</compile_context>

<pallas_src>
import jax
import jax.numpy as jnp
from jax.experimental import pallas as pl
from jax.experimental.pallas import tpu as pltpu


def _softplus(x):
    # Matches torch.nn.Softplus(beta=1, threshold=20)
    return jnp.where(x > 20.0, x, jnp.log1p(jnp.exp(jnp.minimum(x, 20.0))))


def monot_linear_kernel(x_ref, w_ref, sign_ref, bias_ref, pos_ref, o_ref, acc_ref):
    # Grid = (batch tiles, out tiles, in/contraction tiles); contraction is last.
    k = pl.program_id(2)

    @pl.when(k == 0)
    def _():
        acc_ref[...] = jnp.zeros_like(acc_ref)

    # softplus(weight tile) then straight MXU matmul -- no transpose, no sign
    # select on the (In, Out)-sized operand.
    # NOTE(v5e): softplus(W) is recomputed per batch tile; if weights are reused
    # across many batch tiles it can be cached, but the batch grid is tiny here.
    sp = _softplus(w_ref[...])                                   # (tk, tn)
    acc_ref[...] += jnp.dot(x_ref[...], sp,
                            preferred_element_type=jnp.float32)  # (tm, tn)

    @pl.when(k == pl.num_programs(2) - 1)
    def _():
        sign = sign_ref[...]            # (1, tn) f32, +1 / -1
        bias = bias_ref[...]            # (1, tn) f32
        pos = pos_ref[...]              # (1, tn) f32, 0 / 1
        out = acc_ref[...] * sign + bias
        # positive_outs: blend instead of compare+select.
        out = out + pos * (_softplus(out) - out)
        o_ref[...] = out.astype(o_ref.dtype)


def _round_up(x, m):
    return (x + m - 1) // m * m


def monot_linear(x, slope_params, bias, monot_outs, positive_outs,
                 *, tm=None, tn=None, tk=None):
    """x: (B, In) f32; slope_params: (Out, In) f32; bias: (Out,) f32;
       monot_outs: (Out,) bool; positive_outs: (Out,) bool -> (B, Out) f32"""
    B, In = x.shape
    Out = slope_params.shape[0]

    # Lane-dense, MXU-friendly tiles; conservative so double-buffered blocks
    # stay well inside v7x's 32 MiB scoped VMEM as well as v5e/v6e.
    tm = tm or min(256, _round_up(B, 8))
    tn = tn or min(256, _round_up(Out, 128))
    tk = tk or min(512, _round_up(In, 128))

    Bp = _round_up(B, tm)
    Inp = _round_up(In, tk)
    Outp = _round_up(Out, tn)

    f32 = jnp.float32
    x_p = jnp.zeros((Bp, Inp), f32).at[:B, :In].set(x.astype(f32))
    # Weight stored as (In, Out): the MXU consumes it directly (no .T in-kernel).
    w_t = jnp.zeros((Inp, Outp), f32).at[:In, :Out].set(slope_params.astype(f32).T)

    sign = jnp.where(monot_outs, 1.0, -1.0).astype(f32)
    sign_p = jnp.ones((1, Outp), f32).at[0, :Out].set(sign)
    bias_p = jnp.zeros((1, Outp), f32).at[0, :Out].set(bias.astype(f32))
    pos_p = jnp.zeros((1, Outp), f32).at[0, :Out].set(positive_outs.astype(f32))

    grid = (Bp // tm, Outp // tn, Inp // tk)

    cost = pl.CostEstimate(
        flops=2 * Bp * Inp * Outp,
        transcendentals=Inp * Outp + Bp * Outp,
        bytes_accessed=4 * (Bp * Inp + Inp * Outp + Bp * Outp),
    )

    out_p = pl.pallas_call(
        monot_linear_kernel,
        out_shape=jax.ShapeDtypeStruct((Bp, Outp), f32),
        grid_spec=pltpu.PrefetchScalarGridSpec(
            num_scalar_prefetch=0,
            grid=grid,
            in_specs=[
                pl.BlockSpec((tm, tk), lambda i, j, k: (i, k)),   # x
                pl.BlockSpec((tk, tn), lambda i, j, k: (k, j)),   # weight (In, Out)
                pl.BlockSpec((1, tn), lambda i, j, k: (0, j)),    # sign (+1/-1)
                pl.BlockSpec((1, tn), lambda i, j, k: (0, j)),    # bias
                pl.BlockSpec((1, tn), lambda i, j, k: (0, j)),    # positive mask
            ],
            out_specs=pl.BlockSpec((tm, tn), lambda i, j, k: (i, j)),
            scratch_shapes=[pltpu.VMEM((tm, tn), jnp.float32)],
        ),
        compiler_params=pltpu.CompilerParams(
            dimension_semantics=("parallel", "parallel", "arbitrary"),
            vmem_limit_bytes=32 * 1024 * 1024,
        ),
        cost_estimate=cost,
    )(x_p, w_t, sign_p, bias_p, pos_p)

    return out_p[:B, :Out]


def monot_linear_ref(x, slope_params, bias, monot_outs, positive_outs):
    sp = jax.nn.softplus(slope_params)
    slopes = jnp.where(monot_outs[:, None], sp, -sp)
    out = x @ slopes.T + bias[None, :]
    return jnp.where(positive_outs[None, :], jax.nn.softplus(out), out)


if __name__ == "__main__":
    key = jax.random.PRNGKey(0)
    k1, k2, k3 = jax.random.split(key, 3)

    batch = 8
    in_features = 32
    out_features = 16

    softinv1 = 0.541324854612918
    slope_params = jax.random.normal(k1, (out_features, in_features), jnp.float32) + softinv1
    bias = jax.random.normal(k2, (out_features,), jnp.float32)
    x = jax.random.normal(k3, (batch, in_features), jnp.float32)

    # default buffers from __init__: positive_outs all False, monot_outs all True;
    # flip a few entries deterministically to exercise both branches of each where().
    monot_outs = jnp.array([True] * out_features).at[3].set(False).at[7].set(False)
    positive_outs = jnp.array([False] * out_features).at[0].set(True).at[5].set(True)

    out = monot_linear(x, slope_params, bias, monot_outs, positive_outs)
    out = jax.block_until_ready(out)

    ref = monot_linear_ref(x, slope_params, bias, monot_outs, positive_outs)
    assert out.shape == (batch, out_features)
    assert jnp.allclose(out, ref, atol=1e-5, rtol=1e-5), "mismatch vs reference"

    print("KERNEL_OK")
</pallas_src>

<mosaic_0001>
module attributes {stable_mosaic.version = 11 : i64} {
  func.func @monot_linear_kernel(%arg0: i32, %arg1: i32, %arg2: i32, %arg3: memref<8x128xf32, #tpu.memory_space<vmem>>, %arg4: memref<128x128xf32, #tpu.memory_space<vmem>>, %arg5: memref<1x128xf32, #tpu.memory_space<vmem>>, %arg6: memref<1x128xf32, #tpu.memory_space<vmem>>, %arg7: memref<1x128xf32, #tpu.memory_space<vmem>>, %arg8: memref<8x128xf32, #tpu.memory_space<vmem>>, %arg9: memref<8x128xf32, #tpu.memory_space<vmem>>) attributes {dimension_semantics = [#tpu.dimension_semantics<parallel>, #tpu.dimension_semantics<parallel>, #tpu.dimension_semantics<arbitrary>], iteration_bounds = array<i64: 1, 1, 1>, scalar_prefetch = 0 : i64, scratch_operands = 1 : i64, tpu.core_type = #tpu.core_type<tc>, window_params = [{transform_indices = @transform_0, window_bounds = array<i64: 8, 128>}, {transform_indices = @transform_1, window_bounds = array<i64: 128, 128>}, {transform_indices = @transform_2, window_bounds = array<i64: 1, 128>}, {transform_indices = @transform_3, window_bounds = array<i64: 1, 128>}, {transform_indices = @transform_4, window_bounds = array<i64: 1, 128>}, {transform_indices = @transform_5, window_bounds = array<i64: 8, 128>}]} {
    %c0_i32 = arith.constant 0 : i32
    %0 = arith.cmpi eq, %arg2, %c0_i32 : i32
    %1 = arith.extui %0 : i1 to i32
    %c0_i32_0 = arith.constant 0 : i32
    %2 = arith.cmpi ne, %1, %c0_i32_0 : i32
    scf.if %2 {
      %cst_12 = arith.constant 0.000000e+00 : f32
      %19 = vector.broadcast %cst_12 : f32 to vector<8x128xf32>
      %c0_13 = arith.constant 0 : index
      %c0_14 = arith.constant 0 : index
      %20 = vector.load %arg9[%c0_13, %c0_14] : memref<8x128xf32, #tpu.memory_space<vmem>>, vector<8x128xf32>
      tpu.vector_store %arg9[%c0_13, %c0_14], %19 {strides = array<i32>} : memref<8x128xf32, #tpu.memory_space<vmem>>, vector<8x128xf32>,
    } else {
    }
    %c0 = arith.constant 0 : index
    %c0_1 = arith.constant 0 : index
    %3 = vector.load %arg4[%c0, %c0_1] : memref<128x128xf32, #tpu.memory_space<vmem>>, vector<128x128xf32>
    %cst = arith.constant 2.000000e+01 : f32
    %4 = vector.broadcast %cst : f32 to vector<128x128xf32>
    %5 = arith.cmpf ogt, %3, %4 : vector<128x128xf32>
    %cst_2 = arith.constant 2.000000e+01 : f32
    %6 = vector.broadcast %cst_2 : f32 to vector<128x128xf32>
    %7 = arith.minimumf %3, %6 : vector<128x128xf32>
    %8 = math.exp %7 : vector<128x128xf32>
    %9 = math.log1p %8 : vector<128x128xf32>
    %10 = arith.select %5, %3, %9 : vector<128x128xi1>, vector<128x128xf32>
    %c0_3 = arith.constant 0 : index
    %c0_4 = arith.constant 0 : index
    %11 = vector.load %arg9[%c0_3, %c0_4] : memref<8x128xf32, #tpu.memory_space<vmem>>, vector<8x128xf32>
    %c0_5 = arith.constant 0 : index
    %c0_6 = arith.constant 0 : index
    %12 = vector.load %arg3[%c0_5, %c0_6] : memref<8x128xf32, #tpu.memory_space<vmem>>, vector<8x128xf32>
    %cst_7 = arith.constant dense<0.000000e+00> : vector<8x128xf32>
    %13 = tpu.matmul %12, %10, %cst_7 {dimension_numbers = #tpu.dot_dimension_numbers<[1], [0], [0], [1], [0, 0, 1, 1], [], []>} : vector<8x128xf32>, vector<128x128xf32>, vector<8x128xf32> -> vector<8x128xf32>
    %14 = arith.addf %11, %13 : vector<8x128xf32>
    %c0_8 = arith.constant 0 : index
    %c0_9 = arith.constant 0 : index
    %15 = vector.load %arg9[%c0_8, %c0_9] : memref<8x128xf32, #tpu.memory_space<vmem>>, vector<8x128xf32>
    tpu.vector_store %arg9[%c0_8, %c0_9], %14 {strides = array<i32>} : memref<8x128xf32, #tpu.memory_space<vmem>>, vector<8x128xf32>,
    %c0_i32_10 = arith.constant 0 : i32
    %16 = arith.cmpi eq, %arg2, %c0_i32_10 : i32
    %17 = arith.extui %16 : i1 to i32
    %c0_i32_11 = arith.constant 0 : i32
    %18 = arith.cmpi ne, %17, %c0_i32_11 : i32
    scf.if %18 {
      %c0_12 = arith.constant 0 : index
      %c0_13 = arith.constant 0 : index
      %19 = vector.load %arg5[%c0_12, %c0_13] : memref<1x128xf32, #tpu.memory_space<vmem>>, vector<1x128xf32>
      %c0_14 = arith.constant 0 : index
      %c0_15 = arith.constant 0 : index
      %20 = vector.load %arg6[%c0_14, %c0_15] : memref<1x128xf32, #tpu.memory_space<vmem>>, vector<1x128xf32>
      %c0_16 = arith.constant 0 : index
      %c0_17 = arith.constant 0 : index
      %21 = vector.load %arg7[%c0_16, %c0_17] : memref<1x128xf32, #tpu.memory_space<vmem>>, vector<1x128xf32>
      %c0_18 = arith.constant 0 : index
      %c0_19 = arith.constant 0 : index
      %22 = vector.load %arg9[%c0_18, %c0_19] : memref<8x128xf32, #tpu.memory_space<vmem>>, vector<8x128xf32>
      %23 = vector.broadcast %19 : vector<1x128xf32> to vector<8x128xf32>
      %24 = arith.mulf %22, %23 : vector<8x128xf32>
      %25 = vector.broadcast %20 : vector<1x128xf32> to vector<8x128xf32>
      %26 = arith.addf %24, %25 : vector<8x128xf32>
      %cst_20 = arith.constant 2.000000e+01 : f32
      %27 = vector.broadcast %cst_20 : f32 to vector<8x128xf32>
      %28 = arith.cmpf ogt, %26, %27 : vector<8x128xf32>
      %cst_21 = arith.constant 2.000000e+01 : f32
      %29 = vector.broadcast %cst_21 : f32 to vector<8x128xf32>
      %30 = arith.minimumf %26, %29 : vector<8x128xf32>
      %31 = math.exp %30 : vector<8x128xf32>
      %32 = math.log1p %31 : vector<8x128xf32>
      %33 = arith.select %28, %26, %32 : vector<8x128xi1>, vector<8x128xf32>
      %34 = arith.subf %33, %26 : vector<8x128xf32>
      %35 = vector.broadcast %21 : vector<1x128xf32> to vector<8x128xf32>
      %36 = arith.mulf %35, %34 : vector<8x128xf32>
      %37 = arith.addf %26, %36 : vector<8x128xf32>
      %c0_22 = arith.constant 0 : index
      %c0_23 = arith.constant 0 : index
      %38 = vector.load %arg8[%c0_22, %c0_23] : memref<8x128xf32, #tpu.memory_space<vmem>>, vector<8x128xf32>
      tpu.vector_store %arg8[%c0_22, %c0_23], %37 {strides = array<i32>} : memref<8x128xf32, #tpu.memory_space<vmem>>, vector<8x128xf32>,
    } else {
    }
    return
  }
  func.func @transform_0(%arg0: i32, %arg1: i32, %arg2: i32) -> (i32, i32) {
    %c0_i32 = arith.constant 0 : i32
    return %arg0, %arg2 : i32, i32
  }
  func.func @transform_1(%arg0: i32, %arg1: i32, %arg2: i32) -> (i32, i32) {
    %c0_i32 = arith.constant 0 : i32
    return %arg2, %arg1 : i32, i32
  }
  func.func @transform_2(%arg0: i32, %arg1: i32, %arg2: i32) -> (i32, i32) {
    %c0_i32 = arith.constant 0 : i32
    %c0_i32_0 = arith.constant 0 : i32
    return %c0_i32, %arg1 : i32, i32
  }
  func.func @transform_3(%arg0: i32, %arg1: i32, %arg2: i32) -> (i32, i32) {
    %c0_i32 = arith.constant 0 : i32
    %c0_i32_0 = arith.constant 0 : i32
    return %c0_i32, %arg1 : i32, i32
  }
  func.func @transform_4(%arg0: i32, %arg1: i32, %arg2: i32) -> (i32, i32) {
    %c0_i32 = arith.constant 0 : i32
    %c0_i32_0 = arith.constant 0 : i32
    return %c0_i32, %arg1 : i32, i32
  }
  func.func @transform_5(%arg0: i32, %arg1: i32, %arg2: i32) -> (i32, i32) {
    %c0_i32 = arith.constant 0 : i32
    return %arg0, %arg1 : i32, i32
  }
}

</mosaic_0001>

<llo_original>
// kernel: tpu_custom_call.1
$region0: #{tpu_custom_call.1}
  #allocation0 [shape = 'u32[]', space=smem, size = 0x4, offset = 0x4, fixed_abs, tag = 'smem constant byte address 0x4 - core index']
  #allocation1 [shape = 'u32[144,128]{1,0:T(1,128)}', space=vmem, size = 0x12000, scoped, tag = 'internal scratch']
  #allocation2 [shape = 'f32[8,128]{1,0:T(8,128)}', space=vmem, size = 0x1000, scoped, tag = 'scratch operand']
  %s0 = inlined_call_operand.hbm [shape: f32[8,128], index: 0, kind: input, shape index: {}]
  %s1 = inlined_call_operand.hbm [shape: f32[128,128], index: 1, kind: input, shape index: {}]
  %s2 = inlined_call_operand.vmem [shape: f32[1,128], index: 2, kind: input, shape index: {}]
  %s3 = inlined_call_operand.vmem [shape: f32[1,128], index: 3, kind: input, shape index: {}]
  %s4 = inlined_call_operand.vmem [shape: f32[1,128], index: 4, kind: input, shape index: {}]
  %s5 = inlined_call_operand.hbm [shape: f32[8,128], index: 5, kind: output, shape index: {}]
  %s6 = sld [smem:[#allocation0]]
  $region46: #{tpu_custom_call.1} parent=0
    _
  %s8 = ssub.s32 1, %s6
  %s9 = scalar_select 0, %s8, %s6
  $region1: #{tpu_custom_call.1} parent=0
    #allocation3 [shape = 'u8[4096]{0}', space=vmem, size = 0x1000, scoped, tag = 'input window, operand 0, single buffered']
    #allocation4 [shape = 's32[1]{0}', space=sflag, size = 0x4, scoped, tag = 'scoped memory for tpu_custom_call.1']
    #allocation5 [shape = 's32[1]{0}', space=sflag, size = 0x4, scoped, tag = 'scoped memory for tpu_custom_call.1']
    #allocation6 [shape = 'u8[65536]{0}', space=vmem, size = 0x10000, scoped, tag = 'input window, operand 1, single buffered']
    #allocation7 [shape = 's32[1]{0}', space=sflag, size = 0x4, scoped, tag = 'scoped memory for tpu_custom_call.1']
    #allocation8 [shape = 'u8[4096]{0}', space=vmem, size = 0x1000, scoped, tag = 'output window, operand 0, single buffered']
    %10 = vsyncpa [#allocation4], 0
    %11 = vsyncpa [#allocation7], 0
    %12 = vsyncpa [#allocation5], 0
    // Predicated region
    $region2: #{tpu_custom_call.1} parent=1 // pred_check
      _
    $region3: #{tpu_custom_call.1} parent=1 // pred_check_branch
      %14 = sbr.rel (0) target = $region5
    $region4: #{tpu_custom_call.1} parent=1 // pred_region
      %s16 = ssub.s32 128, 128
      %17 = vsyncadd [#allocation4], %s16
      %s19 = sshll.u32 [#allocation3], 4
      %s20 = int_to_ptr.vmem [resolvable:$true] %s19
      %22 = dma.hbm_to_vmem [thread:$0]  %s0, 128, %s20, [#allocation4]
    $region5: #{tpu_custom_call.1} parent=1 // pred_fallthru
      _
    // Predicated region
    $region6: #{tpu_custom_call.1} parent=1 // pred_check
      _
    $region7: #{tpu_custom_call.1} parent=1 // pred_check_branch
      %24 = sbr.rel (0) target = $region9
    $region8: #{tpu_custom_call.1} parent=1 // pred_region
      %s26 = ssub.s32 2048, 2048
      %27 = vsyncadd [#allocation7], %s26
      %s28 = sshll.u32 [#allocation6], 4
      %s29 = int_to_ptr.vmem [resolvable:$true] %s28
      %34 = dma.hbm_to_vmem [thread:$0]  %s1, 2048, %s29, [#allocation7], 128, 128, 8
    $region9: #{tpu_custom_call.1} parent=1 // pred_fallthru
      _
    // Predicated region
    $region10: #{tpu_custom_call.1} parent=1 // pred_check
      _
    $region11: #{tpu_custom_call.1} parent=1 // pred_check_branch
      %36 = sbr.rel (0) target = $region13
    $region12: #{tpu_custom_call.1} parent=1 // pred_region
      _
    $region13: #{tpu_custom_call.1} parent=1 // pred_fallthru
      _
    // Predicated region
    $region14: #{tpu_custom_call.1} parent=1 // pred_check
      _
    $region15: #{tpu_custom_call.1} parent=1 // pred_check_branch
      %38 = sbr.rel (0) target = $region17
    $region16: #{tpu_custom_call.1} parent=1 // pred_region
      _
    $region17: #{tpu_custom_call.1} parent=1 // pred_fallthru
      _
    // Predicated region
    $region18: #{tpu_custom_call.1} parent=1 // pred_check
      _
    $region19: #{tpu_custom_call.1} parent=1 // pred_check_branch
      %40 = sbr.rel (0) target = $region21
    $region20: #{tpu_custom_call.1} parent=1 // pred_region
      _
    $region21: #{tpu_custom_call.1} parent=1 // pred_fallthru
      _
    // Predicated region
    $region22: #{tpu_custom_call.1} parent=1 // pred_check
      _
    $region23: #{tpu_custom_call.1} parent=1 // pred_check_branch
      %42 = sbr.rel (0) target = $region25
    $region24: #{tpu_custom_call.1} parent=1 // pred_region
      %43 = dma.done [#allocation4], 128
    $region25: #{tpu_custom_call.1} parent=1 // pred_fallthru
      _
    // Predicated region
    $region26: #{tpu_custom_call.1} parent=1 // pred_check
      _
    $region27: #{tpu_custom_call.1} parent=1 // pred_check_branch
      %45 = sbr.rel (0) target = $region29
    $region28: #{tpu_custom_call.1} parent=1 // pred_region
      %46 = dma.done [#allocation7], 2048
    $region29: #{tpu_custom_call.1} parent=1 // pred_fallthru
      _
    %p47 = scmp.eq.s32.totalorder 0, 0
    // Predicated region
    $region30: #{tpu_custom_call.1} parent=1 // pred_check
      %p48 = pneg %p47
    $region31: #{tpu_custom_call.1} parent=1 // pred_check_branch
      %50 = sbr.rel (%p48) target = $region33
    $region32: #{tpu_custom_call.1} parent=1 // pred_region
      %51 = vst [vmem:[#allocation2] sm:$0xff] 0.0
    $region33: #{tpu_custom_call.1} parent=1 // pred_fallthru
      _
    %v52 = vld [vmem:[#allocation6] sm:$0xff]
    %v53 = vld [vmem:[#allocation6 + $0x8] sm:$0xff]
    %v54 = vld [vmem:[#allocation6 + $0x10] sm:$0xff]
    %v55 = vld [vmem:[#allocation6 + $0x18] sm:$0xff]
    %v56 = vld [vmem:[#allocation6 + $0x20] sm:$0xff]
    %v57 = vld [vmem:[#allocation6 + $0x28] sm:$0xff]
    %v58 = vld [vmem:[#allocation6 + $0x30] sm:$0xff]
    %v59 = vld [vmem:[#allocation6 + $0x38] sm:$0xff]
    %v60 = vld [vmem:[#allocation6 + $0x40] sm:$0xff]
    %v61 = vld [vmem:[#allocation6 + $0x48] sm:$0xff]
    %v62 = vld [vmem:[#allocation6 + $0x50] sm:$0xff]
    %v63 = vld [vmem:[#allocation6 + $0x58] sm:$0xff]
    %v64 = vld [vmem:[#allocation6 + $0x60] sm:$0xff]
    %v65 = vld [vmem:[#allocation6 + $0x68] sm:$0xff]
    %v66 = vld [vmem:[#allocation6 + $0x70] sm:$0xff]
    %v67 = vld [vmem:[#allocation6 + $0x78] sm:$0xff]
    %vm68 = vcmp.gt.f32.partialorder %v52, 20.0
    %vm69 = vcmp.gt.f32.partialorder %v53, 20.0
    %vm70 = vcmp.gt.f32.partialorder %v54, 20.0
    %vm71 = vcmp.gt.f32.partialorder %v55, 20.0
    %vm72 = vcmp.gt.f32.partialorder %v56, 20.0
    %vm73 = vcmp.gt.f32.partialorder %v57, 20.0
    %vm74 = vcmp.gt.f32.partialorder %v58, 20.0
    %vm75 = vcmp.gt.f32.partialorder %v59, 20.0
    %vm76 = vcmp.gt.f32.partialorder %v60, 20.0
    %vm77 = vcmp.gt.f32.partialorder %v61, 20.0
    %vm78 = vcmp.gt.f32.partialorder %v62, 20.0
    %vm79 = vcmp.gt.f32.partialorder %v63, 20.0
    %vm80 = vcmp.gt.f32.partialorder %v64, 20.0
    %vm81 = vcmp.gt.f32.partialorder %v65, 20.0
    %vm82 = vcmp.gt.f32.partialorder %v66, 20.0
    %vm83 = vcmp.gt.f32.partialorder %v67, 20.0
    %v84 = vmin.f32 %v52, 20.0
    %v85 = vmin.f32 %v53, 20.0
    %v86 = vmin.f32 %v54, 20.0
    %v87 = vmin.f32 %v55, 20.0
    %v88 = vmin.f32 %v56, 20.0
    %v89 = vmin.f32 %v57, 20.0
    %v90 = vmin.f32 %v58, 20.0
    %v91 = vmin.f32 %v59, 20.0
    %v92 = vmin.f32 %v60, 20.0
    %v93 = vmin.f32 %v61, 20.0
    %v94 = vmin.f32 %v62, 20.0
    %v95 = vmin.f32 %v63, 20.0
    %v96 = vmin.f32 %v64, 20.0
    %v97 = vmin.f32 %v65, 20.0
    %v98 = vmin.f32 %v66, 20.0
    %v99 = vmin.f32 %v67, 20.0
    %v100 = vmul.f32 %v84, 1.442695
    %v101 = vpow.pop %v100
    %v102 = vmul.f32 %v85, 1.442695
    %v103 = vpow.pop %v102
    %v104 = vmul.f32 %v86, 1.442695
    %v105 = vpow.pop %v104
    %v106 = vmul.f32 %v87, 1.442695
    %v107 = vpow.pop %v106
    %v108 = vmul.f32 %v88, 1.442695
    %v109 = vpow.pop %v108
    %v110 = vmul.f32 %v89, 1.442695
    %v111 = vpow.pop %v110
    %v112 = vmul.f32 %v90, 1.442695
    %v113 = vpow.pop %v112
    %v114 = vmul.f32 %v91, 1.442695
    %v115 = vpow.pop %v114
    %v116 = vmul.f32 %v92, 1.442695
    %v117 = vpow.pop %v116
    %v118 = vmul.f32 %v93, 1.442695
    %v119 = vpow.pop %v118
    %v120 = vmul.f32 %v94, 1.442695
    %v121 = vpow.pop %v120
    %v122 = vmul.f32 %v95, 1.442695
    %v123 = vpow.pop %v122
    %v124 = vmul.f32 %v96, 1.442695
    %v125 = vpow.pop %v124
    %v126 = vmul.f32 %v97, 1.442695
    %v127 = vpow.pop %v126
    %v128 = vmul.f32 %v98, 1.442695
    %v129 = vpow.pop %v128
    %v130 = vmul.f32 %v99, 1.442695
    %v131 = vpow.pop %v130
    %v132 = vadd.f32 %v101, 1.0
    %v133 = vlog2.pop %v132
    %v134 = vmul.f32 %v133, 0.6931472
    %v135 = vmul.f32 -0.5, %v101
    %v136 = vadd.f32 %v135, 1.0
    %v137 = vmul.f32 %v136, %v101
    %v138 = vand.u32 2147483647, %v101
    %vm139 = vcmp.lt.f32.partialorder %v138, 0.0004427343
    %v140 = vsel %vm139, %v137, %v134
    %v141 = vadd.f32 %v103, 1.0
    %v142 = vlog2.pop %v141
    %v143 = vmul.f32 %v142, 0.6931472
    %v144 = vmul.f32 -0.5, %v103
    %v145 = vadd.f32 %v144, 1.0
    %v146 = vmul.f32 %v145, %v103
    %v147 = vand.u32 2147483647, %v103
    %vm148 = vcmp.lt.f32.partialorder %v147, 0.0004427343
    %v149 = vsel %vm148, %v146, %v143
    %v150 = vadd.f32 %v105, 1.0
    %v151 = vlog2.pop %v150
    %v152 = vmul.f32 %v151, 0.6931472
    %v153 = vmul.f32 -0.5, %v105
    %v154 = vadd.f32 %v153, 1.0
    %v155 = vmul.f32 %v154, %v105
    %v156 = vand.u32 2147483647, %v105
    %vm157 = vcmp.lt.f32.partialorder %v156, 0.0004427343
    %v158 = vsel %vm157, %v155, %v152
    %v159 = vadd.f32 %v107, 1.0
    %v160 = vlog2.pop %v159
    %v161 = vmul.f32 %v160, 0.6931472
    %v162 = vmul.f32 -0.5, %v107
    %v163 = vadd.f32 %v162, 1.0
    %v164 = vmul.f32 %v163, %v107
    %v165 = vand.u32 2147483647, %v107
    %vm166 = vcmp.lt.f32.partialorder %v165, 0.0004427343
    %v167 = vsel %vm166, %v164, %v161
    %v168 = vadd.f32 %v109, 1.0
    %v169 = vlog2.pop %v168
    %v170 = vmul.f32 %v169, 0.6931472
    %v171 = vmul.f32 -0.5, %v109
    %v172 = vadd.f32 %v171, 1.0
    %v173 = vmul.f32 %v172, %v109
    %v174 = vand.u32 2147483647, %v109
    %vm175 = vcmp.lt.f32.partialorder %v174, 0.0004427343
    %v176 = vsel %vm175, %v173, %v170
    %v177 = vadd.f32 %v111, 1.0
    %v178 = vlog2.pop %v177
    %v179 = vmul.f32 %v178, 0.6931472
    %v180 = vmul.f32 -0.5, %v111
    %v181 = vadd.f32 %v180, 1.0
    %v182 = vmul.f32 %v181, %v111
    %v183 = vand.u32 2147483647, %v111
    %vm184 = vcmp.lt.f32.partialorder %v183, 0.0004427343
    %v185 = vsel %vm184, %v182, %v179
    %v186 = vadd.f32 %v113, 1.0
    %v187 = vlog2.pop %v186
    %v188 = vmul.f32 %v187, 0.6931472
    %v189 = vmul.f32 -0.5, %v113
    %v190 = vadd.f32 %v189, 1.0
    %v191 = vmul.f32 %v190, %v113
    %v192 = vand.u32 2147483647, %v113
    %vm193 = vcmp.lt.f32.partialorder %v192, 0.0004427343
    %v194 = vsel %vm193, %v191, %v188
    %v195 = vadd.f32 %v115, 1.0
    %v196 = vlog2.pop %v195
    %v197 = vmul.f32 %v196, 0.6931472
    %v198 = vmul.f32 -0.5, %v115
    %v199 = vadd.f32 %v198, 1.0
    %v200 = vmul.f32 %v199, %v115
    %v201 = vand.u32 2147483647, %v115
    %vm202 = vcmp.lt.f32.partialorder %v201, 0.0004427343
    %v203 = vsel %vm202, %v200, %v197
    %v204 = vadd.f32 %v117, 1.0
    %v205 = vlog2.pop %v204
    %v206 = vmul.f32 %v205, 0.6931472
    %v207 = vmul.f32 -0.5, %v117
    %v208 = vadd.f32 %v207, 1.0
    %v209 = vmul.f32 %v208, %v117
    %v210 = vand.u32 2147483647, %v117
    %vm211 = vcmp.lt.f32.partialorder %v210, 0.0004427343
    %v212 = vsel %vm211, %v209, %v206
    %v213 = vadd.f32 %v119, 1.0
    %v214 = vlog2.pop %v213
    %v215 = vmul.f32 %v214, 0.6931472
    %v216 = vmul.f32 -0.5, %v119
    %v217 = vadd.f32 %v216, 1.0
    %v218 = vmul.f32 %v217, %v119
    %v219 = vand.u32 2147483647, %v119
    %vm220 = vcmp.lt.f32.partialorder %v219, 0.0004427343
    %v221 = vsel %vm220, %v218, %v215
    %v222 = vadd.f32 %v121, 1.0
    %v223 = vlog2.pop %v222
    %v224 = vmul.f32 %v223, 0.6931472
    %v225 = vmul.f32 -0.5, %v121
    %v226 = vadd.f32 %v225, 1.0
    %v227 = vmul.f32 %v226, %v121
    %v228 = vand.u32 2147483647, %v121
    %vm229 = vcmp.lt.f32.partialorder %v228, 0.0004427343
    %v230 = vsel %vm229, %v227, %v224
    %v231 = vadd.f32 %v123, 1.0
    %v232 = vlog2.pop %v231
    %v233 = vmul.f32 %v232, 0.6931472
    %v234 = vmul.f32 -0.5, %v123
    %v235 = vadd.f32 %v234, 1.0
    %v236 = vmul.f32 %v235, %v123
    %v237 = vand.u32 2147483647, %v123
    %vm238 = vcmp.lt.f32.partialorder %v237, 0.0004427343
    %v239 = vsel %vm238, %v236, %v233
    %v240 = vadd.f32 %v125, 1.0
    %v241 = vlog2.pop %v240
    %v242 = vmul.f32 %v241, 0.6931472
    %v243 = vmul.f32 -0.5, %v125
    %v244 = vadd.f32 %v243, 1.0
    %v245 = vmul.f32 %v244, %v125
    %v246 = vand.u32 2147483647, %v125
    %vm247 = vcmp.lt.f32.partialorder %v246, 0.0004427343
    %v248 = vsel %vm247, %v245, %v242
    %v249 = vadd.f32 %v127, 1.0
    %v250 = vlog2.pop %v249
    %v251 = vmul.f32 %v250, 0.6931472
    %v252 = vmul.f32 -0.5, %v127
    %v253 = vadd.f32 %v252, 1.0
    %v254 = vmul.f32 %v253, %v127
    %v255 = vand.u32 2147483647, %v127
    %vm256 = vcmp.lt.f32.partialorder %v255, 0.0004427343
    %v257 = vsel %vm256, %v254, %v251
    %v258 = vadd.f32 %v129, 1.0
    %v259 = vlog2.pop %v258
    %v260 = vmul.f32 %v259, 0.6931472
    %v261 = vmul.f32 -0.5, %v129
    %v262 = vadd.f32 %v261, 1.0
    %v263 = vmul.f32 %v262, %v129
    %v264 = vand.u32 2147483647, %v129
    %vm265 = vcmp.lt.f32.partialorder %v264, 0.0004427343
    %v266 = vsel %vm265, %v263, %v260
    %v267 = vadd.f32 %v131, 1.0
    %v268 = vlog2.pop %v267
    %v269 = vmul.f32 %v268, 0.6931472
    %v270 = vmul.f32 -0.5, %v131
    %v271 = vadd.f32 %v270, 1.0
    %v272 = vmul.f32 %v271, %v131
    %v273 = vand.u32 2147483647, %v131
    %vm274 = vcmp.lt.f32.partialorder %v273, 0.0004427343
    %v275 = vsel %vm274, %v272, %v269
    %v276 = vsel %vm68, %v52, %v140
    %v277 = vsel %vm69, %v53, %v149
    %v278 = vsel %vm70, %v54, %v158
    %v279 = vsel %vm71, %v55, %v167
    %v280 = vsel %vm72, %v56, %v176
    %v281 = vsel %vm73, %v57, %v185
    %v282 = vsel %vm74, %v58, %v194
    %v283 = vsel %vm75, %v59, %v203
    %v284 = vsel %vm76, %v60, %v212
    %v285 = vsel %vm77, %v61, %v221
    %v286 = vsel %vm78, %v62, %v230
    %v287 = vsel %vm79, %v63, %v239
    %v288 = vsel %vm80, %v64, %v248
    %v289 = vsel %vm81, %v65, %v257
    %v290 = vsel %vm82, %v66, %v266
    %v291 = vsel %vm83, %v67, %v275
    %v292 = vld [vmem:[#allocation2] sm:$0xff]
    %v293 = vld [vmem:[#allocation3] sm:$0xff]
    %294 = vmatprep.subr.mxu0 0.0
    %295 = vmatpush1.msra.mxu0 %v276
    %296 = vmatprep.subr.mxu0 0.0
    %297 = vmatpush1.msra.mxu0 %v277
    %298 = vmatprep.subr.mxu0 0.0
    %299 = vmatpush1.msra.mxu0 %v278
    %300 = vmatprep.subr.mxu0 0.0
    %301 = vmatpush1.msra.mxu0 %v279
    %302 = vmatprep.subr.mxu0 0.0
    %303 = vmatpush1.msra.mxu0 %v280
    %304 = vmatprep.subr.mxu0 0.0
    %305 = vmatpush1.msra.mxu0 %v281
    %306 = vmatprep.subr.mxu0 0.0
    %307 = vmatpush1.msra.mxu0 %v282
    %308 = vmatprep.subr.mxu0 0.0
    %309 = vmatpush1.msra.mxu0 %v283
    %310 = vmatprep.subr.mxu0 0.0
    %311 = vmatpush1.msra.mxu0 %v284
    %312 = vmatprep.subr.mxu0 0.0
    %313 = vmatpush1.msra.mxu0 %v285
    %314 = vmatprep.subr.mxu0 0.0
    %315 = vmatpush1.msra.mxu0 %v286
    %316 = vmatprep.subr.mxu0 0.0
    %317 = vmatpush1.msra.mxu0 %v287
    %318 = vmatprep.subr.mxu0 0.0
    %319 = vmatpush1.msra.mxu0 %v288
    %320 = vmatprep.subr.mxu0 0.0
    %321 = vmatpush1.msra.mxu0 %v289
    %322 = vmatprep.subr.mxu0 0.0
    %323 = vmatpush1.msra.mxu0 %v290
    %324 = vmatprep.subr.mxu0 0.0
    %325 = vmatpush1.msra.mxu0 %v291
    %326 = vmatprep.subr.mxu0 0.0
    %327 = vmatpush1.msra.mxu0 0.0
    %328 = vmatprep.subr.mxu0 0.0
    %329 = vmatpush1.msra.mxu0 0.0
    %330 = vmatprep.subr.mxu0 0.0
    %331 = vmatpush1.msra.mxu0 0.0
    %332 = vmatprep.subr.mxu0 0.0
    %333 = vmatpush1.msra.mxu0 0.0
    %334 = vmatprep.subr.mxu0 0.0
    %335 = vmatpush1.msra.mxu0 0.0
    %336 = vmatprep.subr.mxu0 0.0
    %337 = vmatpush1.msra.mxu0 0.0
    %338 = vmatprep.subr.mxu0 0.0
    %339 = vmatpush1.msra.mxu0 0.0
    %340 = vmatprep.subr.mxu0 0.0
    %341 = vmatpush1.msra.mxu0 0.0
    %342 = vmatprep.subr.mxu0 0.0
    %343 = vmatpush1.msra.mxu0 0.0
    %344 = vmatprep.subr.mxu0 0.0
    %345 = vmatpush1.msra.mxu0 0.0
    %346 = vmatprep.subr.mxu0 0.0
    %347 = vmatpush1.msra.mxu0 0.0
    %348 = vmatprep.subr.mxu0 0.0
    %349 = vmatpush1.msra.mxu0 0.0
    %350 = vmatprep.subr.mxu0 0.0
    %351 = vmatpush1.msra.mxu0 0.0
    %352 = vmatprep.subr.mxu0 0.0
    %353 = vmatpush1.msra.mxu0 0.0
    %354 = vmatprep.subr.mxu0 0.0
    %355 = vmatpush1.msra.mxu0 0.0
    %356 = vmatprep.subr.mxu0 0.0
    %357 = vmatpush1.msra.mxu0 0.0
    %358 = vmatprep.mubr.f32.mxu0 0.0
    %359 = vmatmul.mubr.f32.gmra.mrb[0].mxu0 %v293
    %v360 = vpop.f32.mrb[0].mxu0
    %v361 = vadd.f32 0.0, %v360
    %v362 = vpop.f32.mrb[0].mxu0
    %363 = vdwg.mxu0
    %v364 = vadd.f32 %v292, %v361
    %365 = vst [vmem:[#allocation2] sm:$0xff] %v364
    // Predicated region
    $region34: #{tpu_custom_call.1} parent=1 // pred_check
      %p366 = pneg %p47
    $region35: #{tpu_custom_call.1} parent=1 // pred_check_branch
      %368 = sbr.rel (%p366) target = $region37
    $region36: #{tpu_custom_call.1} parent=1 // pred_region
      %v369 = vld [vmem:[%s2] sm:$0x1]
      %v370 = vld [vmem:[%s3] sm:$0x1]
      %v371 = vld [vmem:[%s4] sm:$0x1]
      %v372 = vld [vmem:[#allocation2] sm:$0xff]
      %v374 = vlaneseq
      %v375 = vshrl.u32 %v374, 7
      %v376 = vsub.s32 0, %v375
      %v377 = vrot.slane %v369, %v376
      %v379 = vmul.f32 %v372, %v377
      %v381 = vlaneseq
      %v382 = vshrl.u32 %v381, 7
      %v383 = vsub.s32 0, %v382
      %v384 = vrot.slane %v370, %v383
      %v386 = vadd.f32 %v379, %v384
      %vm387 = vcmp.gt.f32.partialorder %v386, 20.0
      %v388 = vmin.f32 %v386, 20.0
      %v389 = vmul.f32 %v388, 1.442695
      %v390 = vpow.pop %v389
      %v391 = vadd.f32 %v390, 1.0
      %v392 = vlog2.pop %v391
      %v393 = vmul.f32 %v392, 0.6931472
      %v394 = vmul.f32 -0.5, %v390
      %v395 = vadd.f32 %v394, 1.0
      %v396 = vmul.f32 %v395, %v390
      %v397 = vand.u32 2147483647, %v390
      %vm398 = vcmp.lt.f32.partialorder %v397, 0.0004427343
      %v399 = vsel %vm398, %v396, %v393
      %v400 = vsel %vm387, %v386, %v399
      %v401 = vsub.f32 %v400, %v386
      %v403 = vlaneseq
      %v404 = vshrl.u32 %v403, 7
      %v405 = vsub.s32 0, %v404
      %v406 = vrot.slane %v371, %v405
      %v408 = vmul.f32 %v406, %v401
      %v409 = vadd.f32 %v386, %v408
      %410 = vst [vmem:[#allocation8] sm:$0xff] %v409
    $region37: #{tpu_custom_call.1} parent=1 // pred_fallthru
      _
    // Predicated region
    $region38: #{tpu_custom_call.1} parent=1 // pred_check
      _
    $region39: #{tpu_custom_call.1} parent=1 // pred_check_branch
      %412 = sbr.rel (0) target = $region41
    $region40: #{tpu_custom_call.1} parent=1 // pred_region
      %s414 = ssub.s32 128, 128
      %415 = vsyncadd [#allocation5], %s414
      %s417 = sshll.u32 [#allocation8], 4
      %s418 = int_to_ptr.vmem [resolvable:$true] %s417
      %420 = dma.vmem_to_hbm [thread:$0]  %s418, 128, %s5, [#allocation5]
    $region41: #{tpu_custom_call.1} parent=1 // pred_fallthru
      _
    // Predicated region
    $region42: #{tpu_custom_call.1} parent=1 // pred_check
      _
    $region43: #{tpu_custom_call.1} parent=1 // pred_check_branch
      %422 = sbr.rel (0) target = $region45
    $region44: #{tpu_custom_call.1} parent=1 // pred_region
      %423 = dma.done [#allocation5], 128
    $region45: #{tpu_custom_call.1} parent=1 // pred_fallthru
      _
    %424 = vsyncpa [#allocation4], 1
    %425 = vsyncpa [#allocation7], 1
    %426 = vsyncpa [#allocation5], 1

</llo_original>
